<compile_context>
chip_gen: v7x
topology: tpu7x:2x2x1
jax: 0.10.0
libtpu: 0.0.40
codegen_flags: <defaults>
</compile_context>

<pallas_src>
import jax
import jax.numpy as jnp
from jax import lax
from jax.experimental import pallas as pl
from jax.experimental.pallas import tpu as pltpu


def _pairwise_loss_kernel(fi_ref, fj_ref, spl_ref, mask_ref, out_ref):
    """One (TI, TJ) tile; out_ref is a (1, 1) SMEM block with the tile's SSE."""
    fi = fi_ref[...]                                    # (TI, d) f32
    fj = fj_ref[...]                                    # (TJ, d) f32
    # Plain row sums (matches the PyTorch code — NOT squared norms).
    norm_i = jnp.sum(fi, axis=1, keepdims=True)         # (TI, 1)
    norm_j = jnp.sum(fj, axis=1, keepdims=True)         # (TJ, 1)
    # NT matmul on the MXU: contract the feature (lane) axis of both operands
    # directly instead of materializing f.T.
    gram = lax.dot_general(
        fi, fj,
        dimension_numbers=(((1,), (1,)), ((), ())),
        preferred_element_type=jnp.float32)             # (TI, TJ)
    distance = norm_i + norm_j.T - 2.0 * gram           # (TI, TJ)
    diff = distance * mask_ref[...] - spl_ref[...]
    # Per-tile partial sum; the mean's 1/n^2 is applied once in the wrapper.
    out_ref[0, 0] = jnp.sum(diff * diff)


def pairwise_loss(features, shortest_path_length, mask, *, tile=512):
    """PairWiseLoss.forward. features: (n, d); spl, mask: (n, n). Scalar f32."""
    n, d = features.shape
    f = features.astype(jnp.float32)
    spl = shortest_path_length.astype(jnp.float32)
    msk = mask.astype(jnp.float32)

    if n <= tile:
        # Single full-extent block (always legal regardless of alignment).
        ti = tj = n
        n_pad = n
    else:
        ti = tj = tile
        n_pad = pl.cdiv(n, tile) * tile
        if n_pad != n:
            pad = n_pad - n
            # Zero padding is exact: padded rows/cols have mask == spl == 0,
            # so their diff is 0 and the partial sums are unchanged.
            f = jnp.pad(f, ((0, pad), (0, 0)))
            spl = jnp.pad(spl, ((0, pad), (0, pad)))
            msk = jnp.pad(msk, ((0, pad), (0, pad)))

    gi = n_pad // ti
    gj = n_pad // tj

    cost = pl.CostEstimate(
        flops=2 * n_pad * n_pad * d + 6 * n_pad * n_pad,
        transcendentals=0,
        bytes_accessed=4 * (2 * n_pad * d + 2 * n_pad * n_pad + gi * gj),
    )

    partial = pl.pallas_call(
        _pairwise_loss_kernel,
        out_shape=jax.ShapeDtypeStruct((gi, gj), jnp.float32),
        grid=(gi, gj),
        in_specs=[
            pl.BlockSpec((ti, d), lambda i, j: (i, 0)),    # row block of features
            pl.BlockSpec((tj, d), lambda i, j: (j, 0)),    # col block of features
            pl.BlockSpec((ti, tj), lambda i, j: (i, j)),   # shortest_path_length
            pl.BlockSpec((ti, tj), lambda i, j: (i, j)),   # mask
        ],
        # One scalar per grid cell through SMEM (scalar path); summed outside.
        out_specs=pl.BlockSpec((1, 1), lambda i, j: (i, j),
                               memory_space=pltpu.SMEM),
        compiler_params=pltpu.CompilerParams(
            dimension_semantics=("parallel", "parallel")),
        cost_estimate=cost,
    )(f, f, spl, msk)

    # MSELoss default reduction = 'mean' over the true n*n entries.
    return jnp.sum(partial) / (n * n)


def _reference(features, shortest_path_length, mask):
    n = features.shape[0]
    norm = jnp.sum(features, axis=1, keepdims=True)
    norm = jnp.broadcast_to(norm, (n, n))
    gram = lax.dot_general(
        features, features,
        dimension_numbers=(((1,), (1,)), ((), ())),
        preferred_element_type=jnp.float32,
        precision=lax.Precision.HIGHEST)
    distance = norm + norm.T - 2.0 * gram
    return jnp.mean((distance * mask - shortest_path_length) ** 2)


if __name__ == "__main__":
    key = jax.random.PRNGKey(0)

    # Case 1: tiny single-block path (matches the module's toy usage).
    n, d = 8, 32
    k1, k2, k3, k4 = jax.random.split(key, 4)
    features = jax.random.normal(k1, (n, d), dtype=jnp.float32)
    spl = jax.random.uniform(k2, (n, n), dtype=jnp.float32, minval=0.0, maxval=5.0)
    mask = (jax.random.uniform(k3, (n, n)) > 0.3).astype(jnp.float32)

    loss = pairwise_loss(features, spl, mask)
    jax.block_until_ready(loss)
    ref = _reference(features, spl, mask)
    assert jnp.allclose(loss, ref, rtol=1e-4, atol=1e-4), (loss, ref)

    # Case 2: exercises the tiled (2x2 grid) + zero-padding path.
    n2, d2, tile2 = 200, 32, 128
    k5, k6, k7 = jax.random.split(k4, 3)
    features2 = jax.random.normal(k5, (n2, d2), dtype=jnp.float32)
    spl2 = jax.random.uniform(k6, (n2, n2), dtype=jnp.float32, minval=0.0, maxval=5.0)
    mask2 = (jax.random.uniform(k7, (n2, n2)) > 0.3).astype(jnp.float32)

    loss2 = pairwise_loss(features2, spl2, mask2, tile=tile2)
    jax.block_until_ready(loss2)
    ref2 = _reference(features2, spl2, mask2)
    assert jnp.allclose(loss2, ref2, rtol=1e-3, atol=1e-3), (loss2, ref2)

    print("KERNEL_OK")
</pallas_src>

<mosaic_0001>
module attributes {stable_mosaic.version = 11 : i64} {
  func.func @_pairwise_loss_kernel(%arg0: i32, %arg1: i32, %arg2: memref<8x32xf32, #tpu.memory_space<vmem>>, %arg3: memref<8x32xf32, #tpu.memory_space<vmem>>, %arg4: memref<8x8xf32, #tpu.memory_space<vmem>>, %arg5: memref<8x8xf32, #tpu.memory_space<vmem>>, %arg6: memref<1x1xf32, #tpu.memory_space<smem>>) attributes {dimension_semantics = [#tpu.dimension_semantics<parallel>, #tpu.dimension_semantics<parallel>], iteration_bounds = array<i64: 1, 1>, scalar_prefetch = 0 : i64, scratch_operands = 0 : i64, tpu.core_type = #tpu.core_type<tc>, window_params = [{transform_indices = @transform_0, window_bounds = array<i64: 8, 32>}, {transform_indices = @transform_1, window_bounds = array<i64: 8, 32>}, {transform_indices = @transform_2, window_bounds = array<i64: 8, 8>}, {transform_indices = @transform_3, window_bounds = array<i64: 8, 8>}, {transform_indices = @transform_4, window_bounds = array<i64: 1, 1>}]} {
    %c0 = arith.constant 0 : index
    %c0_0 = arith.constant 0 : index
    %0 = vector.load %arg2[%c0, %c0_0] : memref<8x32xf32, #tpu.memory_space<vmem>>, vector<8x32xf32>
    %c0_1 = arith.constant 0 : index
    %c0_2 = arith.constant 0 : index
    %1 = vector.load %arg3[%c0_1, %c0_2] : memref<8x32xf32, #tpu.memory_space<vmem>>, vector<8x32xf32>
    %cst = arith.constant dense<0.000000e+00> : vector<8xf32>
    %2 = vector.multi_reduction <add>, %0, %cst [1] : vector<8x32xf32> to vector<8xf32>
    %3 = vector.shape_cast %2 : vector<8xf32> to vector<8x1xf32>
    %cst_3 = arith.constant dense<0.000000e+00> : vector<8xf32>
    %4 = vector.multi_reduction <add>, %1, %cst_3 [1] : vector<8x32xf32> to vector<8xf32>
    %5 = vector.shape_cast %4 : vector<8xf32> to vector<8x1xf32>
    %cst_4 = arith.constant dense<0.000000e+00> : vector<8x8xf32>
    %6 = tpu.matmul %0, %1, %cst_4 {dimension_numbers = #tpu.dot_dimension_numbers<[1], [1], [0], [0], [0, 0, 1, 0], [], []>} : vector<8x32xf32>, vector<8x32xf32>, vector<8x8xf32> -> vector<8x8xf32>
    %7 = tpu.transpose %5, [1, 0] : vector<8x1xf32> -> vector<1x8xf32>
    %8 = vector.broadcast %3 : vector<8x1xf32> to vector<8x8xf32>
    %9 = vector.broadcast %7 : vector<1x8xf32> to vector<8x8xf32>
    %10 = arith.addf %8, %9 : vector<8x8xf32>
    %cst_5 = arith.constant 2.000000e+00 : f32
    %11 = vector.broadcast %cst_5 : f32 to vector<8x8xf32>
    %12 = arith.mulf %11, %6 : vector<8x8xf32>
    %13 = arith.subf %10, %12 : vector<8x8xf32>
    %c0_6 = arith.constant 0 : index
    %c0_7 = arith.constant 0 : index
    %14 = vector.load %arg5[%c0_6, %c0_7] : memref<8x8xf32, #tpu.memory_space<vmem>>, vector<8x8xf32>
    %15 = arith.mulf %13, %14 : vector<8x8xf32>
    %c0_8 = arith.constant 0 : index
    %c0_9 = arith.constant 0 : index
    %16 = vector.load %arg4[%c0_8, %c0_9] : memref<8x8xf32, #tpu.memory_space<vmem>>, vector<8x8xf32>
    %17 = arith.subf %15, %16 : vector<8x8xf32>
    %18 = arith.mulf %17, %17 : vector<8x8xf32>
    %19 = vector.shape_cast %18 : vector<8x8xf32> to vector<1x8x8xf32>
    %cst_10 = arith.constant dense<0.000000e+00> : vector<1xf32>
    %20 = vector.multi_reduction <add>, %19, %cst_10 [1, 2] : vector<1x8x8xf32> to vector<1xf32>
    %21 = vector.shape_cast %20 : vector<1xf32> to vector<1x1x1xf32>
    %22 = vector.extract %21[0, 0, 0] : f32 from vector<1x1x1xf32>
    %c0_11 = arith.constant 0 : index
    %c0_12 = arith.constant 0 : index
    %23 = memref.load %arg6[%c0_11, %c0_12] : memref<1x1xf32, #tpu.memory_space<smem>>
    memref.store %22, %arg6[%c0_11, %c0_12] : memref<1x1xf32, #tpu.memory_space<smem>>
    return
  }
  func.func @transform_0(%arg0: i32, %arg1: i32) -> (i32, i32) {
    %c0_i32 = arith.constant 0 : i32
    %c0_i32_0 = arith.constant 0 : i32
    return %arg0, %c0_i32 : i32, i32
  }
  func.func @transform_1(%arg0: i32, %arg1: i32) -> (i32, i32) {
    %c0_i32 = arith.constant 0 : i32
    %c0_i32_0 = arith.constant 0 : i32
    return %arg1, %c0_i32 : i32, i32
  }
  func.func @transform_2(%arg0: i32, %arg1: i32) -> (i32, i32) {
    %c0_i32 = arith.constant 0 : i32
    return %arg0, %arg1 : i32, i32
  }
  func.func @transform_3(%arg0: i32, %arg1: i32) -> (i32, i32) {
    %c0_i32 = arith.constant 0 : i32
    return %arg0, %arg1 : i32, i32
  }
  func.func @transform_4(%arg0: i32, %arg1: i32) -> (i32, i32) {
    %c0_i32 = arith.constant 0 : i32
    return %arg0, %arg1 : i32, i32
  }
}

</mosaic_0001>

<llo_original>
// kernel: tpu_custom_call.1
$region0: #{tpu_custom_call.1}
  #allocation0 [shape = 'u32[]', space=smem, size = 0x4, offset = 0x4, fixed_abs, tag = 'smem constant byte address 0x4 - core index']
  #allocation1 [shape = 'u32[144,128]{1,0:T(1,128)}', space=vmem, size = 0x12000, scoped, tag = 'internal scratch']
  %s0 = inlined_call_operand.hbm [shape: f32[8,32], index: 0, kind: input, shape index: {}]
  %s1 = inlined_call_operand.hbm [shape: f32[8,32], index: 1, kind: input, shape index: {}]
  %s2 = inlined_call_operand.hbm [shape: f32[8,8], index: 2, kind: input, shape index: {}]
  %s3 = inlined_call_operand.vmem [shape: f32[8,8], index: 3, kind: input, shape index: {}]
  %s4 = inlined_call_operand.hbm [shape: f32[1,1], index: 4, kind: output, shape index: {}]
  %s5 = sld [smem:[#allocation0]]
  $region38: #{tpu_custom_call.1} parent=0
    _
  %s7 = ssub.s32 1, %s5
  %s8 = scalar_select 0, %s7, %s5
  $region1: #{tpu_custom_call.1} parent=0
    #allocation2 [shape = 'u8[4096]{0}', space=vmem, size = 0x1000, scoped, tag = 'input window, operand 0, single buffered']
    #allocation3 [shape = 's32[1]{0}', space=sflag, size = 0x4, scoped, tag = 'scoped memory for tpu_custom_call.1']
    #allocation4 [shape = 's32[1]{0}', space=sflag, size = 0x4, scoped, tag = 'scoped memory for tpu_custom_call.1']
    #allocation5 [shape = 'u8[4096]{0}', space=vmem, size = 0x1000, scoped, tag = 'input window, operand 1, single buffered']
    #allocation6 [shape = 's32[1]{0}', space=sflag, size = 0x4, scoped, tag = 'scoped memory for tpu_custom_call.1']
    #allocation7 [shape = 'u8[4096]{0}', space=vmem, size = 0x1000, scoped, tag = 'input window, operand 2, single buffered']
    #allocation8 [shape = 'u8[512]{0}', space=smem, size = 0x200, scoped, tag = 'output window, operand 0, single buffered']
    %9 = vsyncpa [#allocation3], 0
    %10 = vsyncpa [#allocation6], 0
    %11 = vsyncpa [#allocation4], 0
    // Predicated region
    $region2: #{tpu_custom_call.1} parent=1 // pred_check
      _
    $region3: #{tpu_custom_call.1} parent=1 // pred_check_branch
      %13 = sbr.rel (0) target = $region5
    $region4: #{tpu_custom_call.1} parent=1 // pred_region
      %s15 = ssub.s32 128, 128
      %16 = vsyncadd [#allocation3], %s15
      %s18 = sshll.u32 [#allocation2], 4
      %s19 = int_to_ptr.vmem [resolvable:$true] %s18
      %21 = dma.hbm_to_vmem [thread:$0]  %s0, 128, %s19, [#allocation3]
    $region5: #{tpu_custom_call.1} parent=1 // pred_fallthru
      _
    // Predicated region
    $region6: #{tpu_custom_call.1} parent=1 // pred_check
      _
    $region7: #{tpu_custom_call.1} parent=1 // pred_check_branch
      %23 = sbr.rel (0) target = $region9
    $region8: #{tpu_custom_call.1} parent=1 // pred_region
      %s25 = ssub.s32 128, 128
      %26 = vsyncadd [#allocation6], %s25
      %s28 = sshll.u32 [#allocation5], 4
      %s29 = int_to_ptr.vmem [resolvable:$true] %s28
      %31 = dma.hbm_to_vmem [thread:$0]  %s1, 128, %s29, [#allocation6]
    $region9: #{tpu_custom_call.1} parent=1 // pred_fallthru
      _
    // Predicated region
    $region10: #{tpu_custom_call.1} parent=1 // pred_check
      _
    $region11: #{tpu_custom_call.1} parent=1 // pred_check_branch
      %33 = sbr.rel (0) target = $region13
    $region12: #{tpu_custom_call.1} parent=1 // pred_region
      %s35 = ssub.s32 128, 128
      %36 = vsyncadd [#allocation6], %s35
      %s38 = sshll.u32 [#allocation7], 4
      %s39 = int_to_ptr.vmem [resolvable:$true] %s38
      %41 = dma.hbm_to_vmem [thread:$0]  %s2, 128, %s39, [#allocation6]
    $region13: #{tpu_custom_call.1} parent=1 // pred_fallthru
      _
    // Predicated region
    $region14: #{tpu_custom_call.1} parent=1 // pred_check
      _
    $region15: #{tpu_custom_call.1} parent=1 // pred_check_branch
      %43 = sbr.rel (0) target = $region17
    $region16: #{tpu_custom_call.1} parent=1 // pred_region
      _
    $region17: #{tpu_custom_call.1} parent=1 // pred_fallthru
      _
    // Predicated region
    $region18: #{tpu_custom_call.1} parent=1 // pred_check
      _
    $region19: #{tpu_custom_call.1} parent=1 // pred_check_branch
      %45 = sbr.rel (0) target = $region21
    $region20: #{tpu_custom_call.1} parent=1 // pred_region
      %46 = dma.done [#allocation3], 128
    $region21: #{tpu_custom_call.1} parent=1 // pred_fallthru
      _
    // Predicated region
    $region22: #{tpu_custom_call.1} parent=1 // pred_check
      _
    $region23: #{tpu_custom_call.1} parent=1 // pred_check_branch
      %48 = sbr.rel (0) target = $region25
    $region24: #{tpu_custom_call.1} parent=1 // pred_region
      %49 = dma.done [#allocation6], 128
    $region25: #{tpu_custom_call.1} parent=1 // pred_fallthru
      _
    // Predicated region
    $region26: #{tpu_custom_call.1} parent=1 // pred_check
      _
    $region27: #{tpu_custom_call.1} parent=1 // pred_check_branch
      %51 = sbr.rel (0) target = $region29
    $region28: #{tpu_custom_call.1} parent=1 // pred_region
      %52 = dma.done [#allocation6], 128
    $region29: #{tpu_custom_call.1} parent=1 // pred_fallthru
      _
    %v53 = vld [vmem:[#allocation2] sm:$0xff]
    %v54 = vld [vmem:[#allocation5] sm:$0xff]
    %vm55 = vcmask 261120
    %v56 = vsel %vm55, %v53, 0.0
    %57 = vadd.xlane.f32.xlu0 %v56
    %v58 = vpop.xlane.xlu0 %57
    %v59 = vsel %vm55, %v54, 0.0
    %60 = vadd.xlane.f32.xlu0 %v59
    %v61 = vpop.xlane.xlu0 %60
    %v63 = vsel %vm55, %v53, 0
    %v66 = vsel %vm55, %v54, 0
    %68 = vmatprep.subr.mxu0 0.0
    %69 = vmatpush1.xpose.msra.mxu0 %v66
    %70 = vmatprep.subr.mxu0 0.0
    %71 = vmatpush1.xpose.msra.mxu0 0.0
    %72 = vmatprep.subr.mxu0 0.0
    %73 = vmatpush1.xpose.msra.mxu0 0.0
    %74 = vmatprep.subr.mxu0 0.0
    %75 = vmatpush1.xpose.msra.mxu0 0.0
    %76 = vmatprep.subr.mxu0 0.0
    %77 = vmatpush1.xpose.msra.mxu0 0.0
    %78 = vmatprep.subr.mxu0 0.0
    %79 = vmatpush1.xpose.msra.mxu0 0.0
    %80 = vmatprep.subr.mxu0 0.0
    %81 = vmatpush1.xpose.msra.mxu0 0.0
    %82 = vmatprep.subr.mxu0 0.0
    %83 = vmatpush1.xpose.msra.mxu0 0.0
    %84 = vmatprep.subr.mxu0 0.0
    %85 = vmatpush1.xpose.msra.mxu0 0.0
    %86 = vmatprep.subr.mxu0 0.0
    %87 = vmatpush1.xpose.msra.mxu0 0.0
    %88 = vmatprep.subr.mxu0 0.0
    %89 = vmatpush1.xpose.msra.mxu0 0.0
    %90 = vmatprep.subr.mxu0 0.0
    %91 = vmatpush1.xpose.msra.mxu0 0.0
    %92 = vmatprep.subr.mxu0 0.0
    %93 = vmatpush1.xpose.msra.mxu0 0.0
    %94 = vmatprep.subr.mxu0 0.0
    %95 = vmatpush1.xpose.msra.mxu0 0.0
    %96 = vmatprep.subr.mxu0 0.0
    %97 = vmatpush1.xpose.msra.mxu0 0.0
    %98 = vmatprep.subr.mxu0 0.0
    %99 = vmatpush1.xpose.msra.mxu0 0.0
    %100 = vmatprep.subr.mxu0 0.0
    %101 = vmatpush1.xpose.msra.mxu0 0.0
    %102 = vmatprep.subr.mxu0 0.0
    %103 = vmatpush1.xpose.msra.mxu0 0.0
    %104 = vmatprep.subr.mxu0 0.0
    %105 = vmatpush1.xpose.msra.mxu0 0.0
    %106 = vmatprep.subr.mxu0 0.0
    %107 = vmatpush1.xpose.msra.mxu0 0.0
    %108 = vmatprep.subr.mxu0 0.0
    %109 = vmatpush1.xpose.msra.mxu0 0.0
    %110 = vmatprep.subr.mxu0 0.0
    %111 = vmatpush1.xpose.msra.mxu0 0.0
    %112 = vmatprep.subr.mxu0 0.0
    %113 = vmatpush1.xpose.msra.mxu0 0.0
    %114 = vmatprep.subr.mxu0 0.0
    %115 = vmatpush1.xpose.msra.mxu0 0.0
    %116 = vmatprep.subr.mxu0 0.0
    %117 = vmatpush1.xpose.msra.mxu0 0.0
    %118 = vmatprep.subr.mxu0 0.0
    %119 = vmatpush1.xpose.msra.mxu0 0.0
    %120 = vmatprep.subr.mxu0 0.0
    %121 = vmatpush1.xpose.msra.mxu0 0.0
    %122 = vmatprep.subr.mxu0 0.0
    %123 = vmatpush1.xpose.msra.mxu0 0.0
    %124 = vmatprep.subr.mxu0 0.0
    %125 = vmatpush1.xpose.msra.mxu0 0.0
    %126 = vmatprep.subr.mxu0 0.0
    %127 = vmatpush1.xpose.msra.mxu0 0.0
    %128 = vmatprep.subr.mxu0 0.0
    %129 = vmatpush1.xpose.msra.mxu0 0.0
    %130 = vmatprep.subr.mxu0 0.0
    %131 = vmatpush1.xpose.msra.mxu0 0.0
    %132 = vmatprep.mubr.f32.mxu0 0.0
    %133 = vmatmul.mubr.f32.gmra.mrb[0].mxu0 %v63
    %v134 = vpop.f32.mrb[0].mxu0
    %v135 = vadd.f32 0.0, %v134
    %v136 = vpop.f32.mrb[0].mxu0
    %137 = vdwg.mxu0
    %138 = vxpose.xlu0.b32.start [1/16] %v61, 128
    %139 = vxpose.xlu0.b32.cont [2/16] 0.0, 128
    %140 = vxpose.xlu0.b32.cont [3/16] 0.0, 128
    %141 = vxpose.xlu0.b32.cont [4/16] 0.0, 128
    %142 = vxpose.xlu0.b32.cont [5/16] 0.0, 128
    %143 = vxpose.xlu0.b32.cont [6/16] 0.0, 128
    %144 = vxpose.xlu0.b32.cont [7/16] 0.0, 128
    %145 = vxpose.xlu0.b32.cont [8/16] 0.0, 128
    %146 = vxpose.xlu0.b32.cont [9/16] 0.0, 128
    %147 = vxpose.xlu0.b32.cont [10/16] 0.0, 128
    %148 = vxpose.xlu0.b32.cont [11/16] 0.0, 128
    %149 = vxpose.xlu0.b32.cont [12/16] 0.0, 128
    %150 = vxpose.xlu0.b32.cont [13/16] 0.0, 128
    %151 = vxpose.xlu0.b32.cont [14/16] 0.0, 128
    %152 = vxpose.xlu0.b32.cont [15/16] 0.0, 128
    %153 = vxpose.xlu0.b32.end [16/16] 0.0, 128
    %v154 = vpop.trf.xlu0
    %v155 = vpop.trf.xlu0
    %v156 = vpop.trf.xlu0
    %v157 = vpop.trf.xlu0
    %v158 = vpop.trf.xlu0
    %v159 = vpop.trf.xlu0
    %v160 = vpop.trf.xlu0
    %v161 = vpop.trf.xlu0
    %v162 = vpop.trf.xlu0
    %v163 = vpop.trf.xlu0
    %v164 = vpop.trf.xlu0
    %v165 = vpop.trf.xlu0
    %v166 = vpop.trf.xlu0
    %v167 = vpop.trf.xlu0
    %v168 = vpop.trf.xlu0
    %v169 = vpop.trf.xlu0
    %v170 = vlaneseq
    %v171 = vshrl.u32 %v170, 7
    %v172 = vsub.s32 0, %v171
    %v173 = vrot.slane %v154, %v172
    %v174 = vadd.f32 %v58, %v173
    %v175 = vmul.f32 %v135, 2.0
    %v176 = vsub.f32 %v174, %v175
    %v177 = vld [vmem:[%s3] sm:$0xff]
    %v178 = vmul.f32 %v176, %v177
    %v179 = vld [vmem:[#allocation7] sm:$0xff]
    %v180 = vsub.f32 %v178, %v179
    %v181 = vmul.f32 %v180, %v180
    %vm182 = vcmask 64512
    %v183 = vsel %vm182, %v181, 0.0
    %184 = vadd.xlane.f32.xlu0 %v183
    %v185 = vpop.xlane.xlu0 %184
    %v186 = vrot.slane %v185, 4
    %v187 = vadd.f32 %v185, %v186
    %v188 = vrot.slane %v187, 2
    %v189 = vadd.f32 %v187, %v188
    %v190 = vrot.slane %v189, 1
    %v191 = vadd.f32 %v189, %v190
    %s192 = vtos %v191
    %s193 = scalar_lea.smem [#allocation8], 0
    %194 = sst [smem:[%s193]] %s192
    // Predicated region
    $region30: #{tpu_custom_call.1} parent=1 // pred_check
      _
    $region31: #{tpu_custom_call.1} parent=1 // pred_check_branch
      %196 = sbr.rel (0) target = $region33
    $region32: #{tpu_custom_call.1} parent=1 // pred_region
      %s198 = ssub.s32 16, 16
      %199 = vsyncadd [#allocation4], %s198
      %202 = dma.smem_to_hbm [#allocation8], 16, %s4, [#allocation4]
    $region33: #{tpu_custom_call.1} parent=1 // pred_fallthru
      _
    // Predicated region
    $region34: #{tpu_custom_call.1} parent=1 // pred_check
      _
    $region35: #{tpu_custom_call.1} parent=1 // pred_check_branch
      %204 = sbr.rel (0) target = $region37
    $region36: #{tpu_custom_call.1} parent=1 // pred_region
      %205 = dma.done [#allocation4], 16
    $region37: #{tpu_custom_call.1} parent=1 // pred_fallthru
      _
    %206 = sfence
    %207 = vsyncpa [#allocation3], 1
    %208 = vsyncpa [#allocation6], 1
    %209 = vsyncpa [#allocation4], 1

</llo_original>
